<compile_context>
chip_gen: v7x
topology: tpu7x:2x2x1
jax: 0.10.0
libtpu: 0.0.40
codegen_flags: <defaults>
</compile_context>

<pallas_src>
import functools

import jax
import jax.numpy as jnp
from jax.experimental import pallas as pl
from jax.experimental.pallas import tpu as pltpu


def _round_up(x, m):
    return ((x + m - 1) // m) * m


def _fused_rnd_kernel(x_ref, w1_ref, b1_ref, w2_ref, b2_ref, w3_ref, b3_ref, out_ref):
    """One (network, batch-tile) grid point: full 3-layer MLP on one batch tile.

    Matmul inputs are bf16 (native MXU rate on v5e/v6e/v7x); accumulation,
    bias add and ReLU stay in float32.
    """
    x = x_ref[...].astype(jnp.bfloat16)

    h1 = jnp.dot(x, w1_ref[...], preferred_element_type=jnp.float32) + b1_ref[...]
    h1 = jnp.maximum(h1, 0.0)

    h2 = jnp.dot(h1.astype(jnp.bfloat16), w2_ref[...],
                 preferred_element_type=jnp.float32) + b2_ref[...]
    h2 = jnp.maximum(h2, 0.0)

    h3 = jnp.dot(h2.astype(jnp.bfloat16), w3_ref[...],
                 preferred_element_type=jnp.float32) + b3_ref[...]
    out_ref[...] = h3.astype(out_ref.dtype)


@functools.partial(jax.jit, static_argnames=("block_batch",))
def rnd_forward(x, predictor_params, target_params, *, block_batch=256):
    """Equivalent of RNDModel.forward: returns (predict_feature, target_feature).

    Both MLPs run inside one pallas_call; grid = (network, batch_tile).
    """
    # Stack per-layer params of the two networks: index 0 = predictor, 1 = target.
    w1, b1, w2, b2, w3, b3 = [
        jnp.stack([p, t]) for p, t in zip(predictor_params, target_params)
    ]

    batch, in_size = x.shape
    hidden = w3.shape[-1]

    # Batch tile: multiple of 8 sublanes, padded so the grid divides evenly.
    tb = min(block_batch, _round_up(batch, 8))
    batch_pad = _round_up(batch, tb)
    if batch_pad != batch:
        x = jnp.pad(x, ((0, batch_pad - batch), (0, 0)))
    n_btiles = batch_pad // tb

    def w_spec(arr):
        # Leading (network) dim squeezed out of the kernel ref; weights are
        # resident per network (re-DMA'd only when the network index changes).
        return pl.BlockSpec((None,) + arr.shape[1:], lambda m, b: (m, 0, 0))

    # Rough double-buffered VMEM need; request it explicitly, capped at 32 MiB
    # so the kernel stays inside v7x's smaller VMEM without retuning.
    bytes_needed = 2 * (
        tb * in_size * x.dtype.itemsize            # x tile
        + w1[0].size * w1.dtype.itemsize           # layer-1 weight (bf16)
        + w2[0].size * w2.dtype.itemsize           # layer-2 weight (bf16)
        + w3[0].size * w3.dtype.itemsize           # layer-3 weight (bf16)
        + 3 * hidden * 4                           # biases (f32)
        + tb * hidden * 4                          # output tile (f32)
    )
    vmem_limit = min(max(2 * bytes_needed, 16 * 1024 * 1024), 32 * 1024 * 1024)

    # TODO(synk): for very large flattened input_size, add a K-reduction grid
    # axis (f32 VMEM accumulator + pl.when init/finalize) for layer 1 so the
    # (in x H) weight tile stays bounded on v7x's 64 MiB VMEM.
    out = pl.pallas_call(
        _fused_rnd_kernel,
        out_shape=jax.ShapeDtypeStruct((2, batch_pad, hidden), jnp.float32),
        grid=(2, n_btiles),
        in_specs=[
            pl.BlockSpec((tb, in_size), lambda m, b: (b, 0)),   # x shared by both nets
            w_spec(w1), w_spec(b1),
            w_spec(w2), w_spec(b2),
            w_spec(w3), w_spec(b3),
        ],
        out_specs=pl.BlockSpec((None, tb, hidden), lambda m, b: (m, b, 0)),
        compiler_params=pltpu.CompilerParams(
            dimension_semantics=("parallel", "parallel"),
            vmem_limit_bytes=vmem_limit,
        ),
    )(x, w1, b1, w2, b2, w3, b3)

    predict_feature = out[0, :batch]
    target_feature = out[1, :batch]
    return predict_feature, target_feature


def init_mlp_params(key, input_size, hidden_size):
    """Deterministic init mimicking nn.Linear's default U(-1/sqrt(fan_in), +).

    Weights stored pre-transposed (in, out) in bf16 (MXU-native, half HBM traffic);
    biases in f32.
    """
    dims = [
        (input_size, hidden_size),
        (hidden_size, hidden_size),
        (hidden_size, hidden_size),
    ]
    params = []
    for fan_in, fan_out in dims:
        key, kw, kb = jax.random.split(key, 3)
        bound = float(fan_in) ** -0.5
        w = jax.random.uniform(
            kw, (fan_in, fan_out), jnp.float32, -bound, bound
        ).astype(jnp.bfloat16)
        b = jax.random.uniform(kb, (1, fan_out), jnp.float32, -bound, bound)
        params.extend([w, b])
    return tuple(params), key


def rnd_forward_ref(x, predictor_params, target_params):
    """Pure-JAX reference (same bf16-input / f32-accumulate math) for verification."""

    def mlp(x, w1, b1, w2, b2, w3, b3):
        h = jnp.dot(x.astype(jnp.bfloat16), w1,
                    preferred_element_type=jnp.float32) + b1
        h = jnp.maximum(h, 0.0)
        h = jnp.dot(h.astype(jnp.bfloat16), w2,
                    preferred_element_type=jnp.float32) + b2
        h = jnp.maximum(h, 0.0)
        return jnp.dot(h.astype(jnp.bfloat16), w3,
                       preferred_element_type=jnp.float32) + b3

    return mlp(x, *predictor_params), mlp(x, *target_params)


if __name__ == "__main__":
    batch = 64          # small demo batch; block_batch below exercises batch tiling
    input_size = 64
    hidden_size = 128   # small stand-in for the default 256

    key = jax.random.PRNGKey(0)
    key, kx = jax.random.split(key)
    x = jax.random.normal(kx, (batch, input_size), jnp.float32)

    key, kt, kp = jax.random.split(key, 3)
    target_params, _ = init_mlp_params(kt, input_size, hidden_size)
    predictor_params, _ = init_mlp_params(kp, input_size, hidden_size)

    predict_feature, target_feature = rnd_forward(
        x, predictor_params, target_params, block_batch=32
    )
    jax.block_until_ready((predict_feature, target_feature))

    # Sanity check against the pure-JAX reference (same bf16 matmul precision).
    ref_pred, ref_tgt = rnd_forward_ref(x, predictor_params, target_params)
    assert predict_feature.shape == (batch, hidden_size)
    assert target_feature.shape == (batch, hidden_size)
    assert jnp.allclose(predict_feature, ref_pred, atol=5e-3, rtol=5e-3)
    assert jnp.allclose(target_feature, ref_tgt, atol=5e-3, rtol=5e-3)

    print("KERNEL_OK")
</pallas_src>

<mosaic_0001>
module attributes {stable_mosaic.version = 11 : i64} {
  func.func @_fused_rnd_kernel(%arg0: i32, %arg1: i32, %arg2: memref<32x64xf32, #tpu.memory_space<vmem>>, %arg3: memref<1x64x128xbf16, #tpu.memory_space<vmem>>, %arg4: memref<1x1x128xf32, #tpu.memory_space<vmem>>, %arg5: memref<1x128x128xbf16, #tpu.memory_space<vmem>>, %arg6: memref<1x1x128xf32, #tpu.memory_space<vmem>>, %arg7: memref<1x128x128xbf16, #tpu.memory_space<vmem>>, %arg8: memref<1x1x128xf32, #tpu.memory_space<vmem>>, %arg9: memref<1x32x128xf32, #tpu.memory_space<vmem>>) attributes {dimension_semantics = [#tpu.dimension_semantics<parallel>, #tpu.dimension_semantics<parallel>], iteration_bounds = array<i64: 2, 2>, scalar_prefetch = 0 : i64, scratch_operands = 0 : i64, tpu.core_type = #tpu.core_type<tc>, window_params = [{transform_indices = @transform_0, window_bounds = array<i64: 32, 64>}, {transform_indices = @transform_1, window_bounds = array<i64: 1, 64, 128>}, {transform_indices = @transform_2, window_bounds = array<i64: 1, 1, 128>}, {transform_indices = @transform_3, window_bounds = array<i64: 1, 128, 128>}, {transform_indices = @transform_4, window_bounds = array<i64: 1, 1, 128>}, {transform_indices = @transform_5, window_bounds = array<i64: 1, 128, 128>}, {transform_indices = @transform_6, window_bounds = array<i64: 1, 1, 128>}, {transform_indices = @transform_7, window_bounds = array<i64: 1, 32, 128>}]} {
    %c0 = arith.constant 0 : index
    %c0_0 = arith.constant 0 : index
    %0 = vector.load %arg2[%c0, %c0_0] : memref<32x64xf32, #tpu.memory_space<vmem>>, vector<32x64xf32>
    %1 = arith.truncf %0 : vector<32x64xf32> to vector<32x64xbf16>
    %c0_1 = arith.constant 0 : index
    %c0_2 = arith.constant 0 : index
    %c0_3 = arith.constant 0 : index
    %2 = vector.load %arg3[%c0_1, %c0_2, %c0_3] : memref<1x64x128xbf16, #tpu.memory_space<vmem>>, vector<1x64x128xbf16>
    %3 = vector.shape_cast %2 : vector<1x64x128xbf16> to vector<64x128xbf16>
    %cst = arith.constant dense<0.000000e+00> : vector<32x128xf32>
    %4 = tpu.matmul %1, %3, %cst {dimension_numbers = #tpu.dot_dimension_numbers<[1], [0], [0], [1], [0, 0, 1, 1], [], []>} : vector<32x64xbf16>, vector<64x128xbf16>, vector<32x128xf32> -> vector<32x128xf32>
    %c0_4 = arith.constant 0 : index
    %c0_5 = arith.constant 0 : index
    %c0_6 = arith.constant 0 : index
    %5 = vector.load %arg4[%c0_4, %c0_5, %c0_6] : memref<1x1x128xf32, #tpu.memory_space<vmem>>, vector<1x1x128xf32>
    %6 = vector.shape_cast %5 : vector<1x1x128xf32> to vector<1x128xf32>
    %7 = vector.broadcast %6 : vector<1x128xf32> to vector<32x128xf32>
    %8 = arith.addf %4, %7 : vector<32x128xf32>
    %cst_7 = arith.constant 0.000000e+00 : f32
    %9 = vector.broadcast %cst_7 : f32 to vector<32x128xf32>
    %10 = arith.maximumf %8, %9 : vector<32x128xf32>
    %11 = arith.truncf %10 : vector<32x128xf32> to vector<32x128xbf16>
    %c0_8 = arith.constant 0 : index
    %c0_9 = arith.constant 0 : index
    %c0_10 = arith.constant 0 : index
    %12 = vector.load %arg5[%c0_8, %c0_9, %c0_10] : memref<1x128x128xbf16, #tpu.memory_space<vmem>>, vector<1x128x128xbf16>
    %13 = vector.shape_cast %12 : vector<1x128x128xbf16> to vector<128x128xbf16>
    %cst_11 = arith.constant dense<0.000000e+00> : vector<32x128xf32>
    %14 = tpu.matmul %11, %13, %cst_11 {dimension_numbers = #tpu.dot_dimension_numbers<[1], [0], [0], [1], [0, 0, 1, 1], [], []>} : vector<32x128xbf16>, vector<128x128xbf16>, vector<32x128xf32> -> vector<32x128xf32>
    %c0_12 = arith.constant 0 : index
    %c0_13 = arith.constant 0 : index
    %c0_14 = arith.constant 0 : index
    %15 = vector.load %arg6[%c0_12, %c0_13, %c0_14] : memref<1x1x128xf32, #tpu.memory_space<vmem>>, vector<1x1x128xf32>
    %16 = vector.shape_cast %15 : vector<1x1x128xf32> to vector<1x128xf32>
    %17 = vector.broadcast %16 : vector<1x128xf32> to vector<32x128xf32>
    %18 = arith.addf %14, %17 : vector<32x128xf32>
    %cst_15 = arith.constant 0.000000e+00 : f32
    %19 = vector.broadcast %cst_15 : f32 to vector<32x128xf32>
    %20 = arith.maximumf %18, %19 : vector<32x128xf32>
    %21 = arith.truncf %20 : vector<32x128xf32> to vector<32x128xbf16>
    %c0_16 = arith.constant 0 : index
    %c0_17 = arith.constant 0 : index
    %c0_18 = arith.constant 0 : index
    %22 = vector.load %arg7[%c0_16, %c0_17, %c0_18] : memref<1x128x128xbf16, #tpu.memory_space<vmem>>, vector<1x128x128xbf16>
    %23 = vector.shape_cast %22 : vector<1x128x128xbf16> to vector<128x128xbf16>
    %cst_19 = arith.constant dense<0.000000e+00> : vector<32x128xf32>
    %24 = tpu.matmul %21, %23, %cst_19 {dimension_numbers = #tpu.dot_dimension_numbers<[1], [0], [0], [1], [0, 0, 1, 1], [], []>} : vector<32x128xbf16>, vector<128x128xbf16>, vector<32x128xf32> -> vector<32x128xf32>
    %c0_20 = arith.constant 0 : index
    %c0_21 = arith.constant 0 : index
    %c0_22 = arith.constant 0 : index
    %25 = vector.load %arg8[%c0_20, %c0_21, %c0_22] : memref<1x1x128xf32, #tpu.memory_space<vmem>>, vector<1x1x128xf32>
    %26 = vector.shape_cast %25 : vector<1x1x128xf32> to vector<1x128xf32>
    %27 = vector.broadcast %26 : vector<1x128xf32> to vector<32x128xf32>
    %28 = arith.addf %24, %27 : vector<32x128xf32>
    %c0_23 = arith.constant 0 : index
    %c0_24 = arith.constant 0 : index
    %c0_25 = arith.constant 0 : index
    %29 = vector.load %arg9[%c0_23, %c0_24, %c0_25] : memref<1x32x128xf32, #tpu.memory_space<vmem>>, vector<1x32x128xf32>
    %30 = vector.shape_cast %29 : vector<1x32x128xf32> to vector<32x128xf32>
    %31 = vector.shape_cast %28 : vector<32x128xf32> to vector<1x32x128xf32>
    tpu.vector_store %arg9[%c0_23, %c0_24, %c0_25], %31 {strides = array<i32>} : memref<1x32x128xf32, #tpu.memory_space<vmem>>, vector<1x32x128xf32>,
    return
  }
  func.func @transform_0(%arg0: i32, %arg1: i32) -> (i32, i32) {
    %c0_i32 = arith.constant 0 : i32
    %c0_i32_0 = arith.constant 0 : i32
    return %arg1, %c0_i32 : i32, i32
  }
  func.func @transform_1(%arg0: i32, %arg1: i32) -> (i32, i32, i32) {
    %c0_i32 = arith.constant 0 : i32
    %c0_i32_0 = arith.constant 0 : i32
    %c0_i32_1 = arith.constant 0 : i32
    return %arg0, %c0_i32, %c0_i32_0 : i32, i32, i32
  }
  func.func @transform_2(%arg0: i32, %arg1: i32) -> (i32, i32, i32) {
    %c0_i32 = arith.constant 0 : i32
    %c0_i32_0 = arith.constant 0 : i32
    %c0_i32_1 = arith.constant 0 : i32
    return %arg0, %c0_i32, %c0_i32_0 : i32, i32, i32
  }
  func.func @transform_3(%arg0: i32, %arg1: i32) -> (i32, i32, i32) {
    %c0_i32 = arith.constant 0 : i32
    %c0_i32_0 = arith.constant 0 : i32
    %c0_i32_1 = arith.constant 0 : i32
    return %arg0, %c0_i32, %c0_i32_0 : i32, i32, i32
  }
  func.func @transform_4(%arg0: i32, %arg1: i32) -> (i32, i32, i32) {
    %c0_i32 = arith.constant 0 : i32
    %c0_i32_0 = arith.constant 0 : i32
    %c0_i32_1 = arith.constant 0 : i32
    return %arg0, %c0_i32, %c0_i32_0 : i32, i32, i32
  }
  func.func @transform_5(%arg0: i32, %arg1: i32) -> (i32, i32, i32) {
    %c0_i32 = arith.constant 0 : i32
    %c0_i32_0 = arith.constant 0 : i32
    %c0_i32_1 = arith.constant 0 : i32
    return %arg0, %c0_i32, %c0_i32_0 : i32, i32, i32
  }
  func.func @transform_6(%arg0: i32, %arg1: i32) -> (i32, i32, i32) {
    %c0_i32 = arith.constant 0 : i32
    %c0_i32_0 = arith.constant 0 : i32
    %c0_i32_1 = arith.constant 0 : i32
    return %arg0, %c0_i32, %c0_i32_0 : i32, i32, i32
  }
  func.func @transform_7(%arg0: i32, %arg1: i32) -> (i32, i32, i32) {
    %c0_i32 = arith.constant 0 : i32
    %c0_i32_0 = arith.constant 0 : i32
    return %arg0, %arg1, %c0_i32 : i32, i32, i32
  }
}

</mosaic_0001>

<llo_original>
// kernel: rnd_forward.1
$region0: #{rnd_forward.1}
  #allocation0 [shape = 'u32[]', space=smem, size = 0x4, offset = 0x4, fixed_abs, tag = 'smem constant byte address 0x4 - core index']
  #allocation1 [shape = 'u32[144,128]{1,0:T(1,128)}', space=vmem, size = 0x12000, scoped, tag = 'internal scratch']
  %s0 = inlined_call_operand.vmem [shape: f32[64,64], index: 0, kind: input, shape index: {}]
  %s1 = inlined_call_operand.vmem [shape: bf16[2,64,128], index: 1, kind: input, shape index: {}]
  %s2 = inlined_call_operand.vmem [shape: f32[2,1,128], index: 2, kind: input, shape index: {}]
  %s3 = inlined_call_operand.vmem [shape: bf16[2,128,128], index: 3, kind: input, shape index: {}]
  %s4 = inlined_call_operand.vmem [shape: f32[2,1,128], index: 4, kind: input, shape index: {}]
  %s5 = inlined_call_operand.vmem [shape: bf16[2,128,128], index: 5, kind: input, shape index: {}]
  %s6 = inlined_call_operand.vmem [shape: f32[2,1,128], index: 6, kind: input, shape index: {}]
  %s7 = inlined_call_operand.vmem [shape: f32[2,64,128], index: 7, kind: output, shape index: {}]
  %s8 = sld [smem:[#allocation0]]
  $region61: #{rnd_forward.1} parent=0
    _
  %s10 = ssub.s32 1, %s8
  %s11 = scalar_select 0, %s10, %s8
  loop: start=0, step=1, limit=6
  $region2: #{rnd_forward.1} parent=0 // loop_pre_header
    _
  $region3: #{rnd_forward.1} parent=0 // loop_header
    %s13 = sphi 0, %s17
    %p14 = scmp.ge.s32.totalorder %s13, 6
    %s20 = sphi 0, %s32
    %s21 = sphi 0, %s28
    %s22 = sphi 0, %s20
    %s23 = sphi 0, %s21
    %s24 = sphi 0, %s22
    %s25 = sphi 0, %s23
    %s35 = sphi 0, %s37
    %s38 = sphi 0, %s35
    %s39 = sphi 0, %s38
    %s55 = sphi 0, %s39
    %s61 = sphi 0, %s63
    %s64 = sphi 0, %s61
    %s65 = sphi 0, %s64
    %s81 = sphi 0, %s65
    %s87 = sphi 0, %s89
    %s90 = sphi 0, %s87
    %s91 = sphi 0, %s90
    %s107 = sphi 0, %s91
    %s113 = sphi 0, %s115
    %s116 = sphi 0, %s113
    %s117 = sphi 0, %s116
    %s133 = sphi 0, %s117
    %s139 = sphi 0, %s141
    %s142 = sphi 0, %s139
    %s143 = sphi 0, %s142
    %s159 = sphi 0, %s143
    %s165 = sphi 0, %s167
    %s168 = sphi 0, %s165
    %s169 = sphi 0, %s168
    %s185 = sphi 0, %s169
    %s191 = sphi 0, %s193
    %s194 = sphi 0, %s191
    %s195 = sphi 0, %s194
    %s211 = sphi 0, %s195
    %s219 = sphi 0, %s221
    %s222 = sphi 0, %s219
    %s223 = sphi 0, %s222
    %s239 = sphi 0, %s223
  $region4: #{rnd_forward.1} parent=0 // loop_header_branch
    %16 = sbr.rel (%p14) target = $region8
  $region5: #{rnd_forward.1} parent=0 // loop_body
    %s18 = ssub.s32 %s13, 1
    %s19 = ssub.s32 %s13, 2
    %s26 = sadd.s32 1, %s21
    %p27 = scmp.ge.s32.totalorder %s26, 2
    %s28 = scalar_select %p27, 0, %s26
    %s29 = sadd.s32 1, %s20
    %s30 = scalar_select %p27, %s29, %s20
    %p31 = scmp.ge.s32.totalorder %s30, 2
    %s32 = scalar_select %p31, 0, %s30
    %s33 = ssub.s32 %s21, %s28
    %p34 = scmp.eq.s32.totalorder %s33, 0
    %s36 = sadd.s32 %s35, 1
    %s37 = scalar_select %p34, %s35, %s36
    %p40 = pneg %p34
    %p41 = scmp.eq.s32.totalorder %s13, 3
    %p42 = por %p40, %p41
    %p43 = scmp.ne.s32.totalorder %s35, %s38
    %p44 = scmp.eq.s32.totalorder %s13, 0
    %p45 = por %p43, %p44
    %p46 = scmp.ne.s32.totalorder %s35, %s38
    %p47 = scmp.eq.s32.totalorder %s18, 3
    %p48 = por %p46, %p47
    %p49 = scmp.ne.s32.totalorder %s38, %s39
    %p50 = scmp.eq.s32.totalorder %s18, 0
    %p51 = por %p49, %p50
    %p52 = scmp.ne.s32.totalorder %s38, %s39
    %p53 = scmp.eq.s32.totalorder %s19, 3
    %p54 = por %p52, %p53
    %p56 = scmp.ne.s32.totalorder %s39, %s55
    %p57 = scmp.eq.s32.totalorder %s19, 0
    %p58 = por %p56, %p57
    %s59 = ssub.s32 %s20, %s32
    %p60 = scmp.eq.s32.totalorder %s59, 0
    %s62 = sadd.s32 %s61, 1
    %s63 = scalar_select %p60, %s61, %s62
    %p66 = pneg %p60
    %p67 = scmp.eq.s32.totalorder %s13, 3
    %p68 = por %p66, %p67
    %p69 = scmp.ne.s32.totalorder %s61, %s64
    %p70 = scmp.eq.s32.totalorder %s13, 0
    %p71 = por %p69, %p70
    %p72 = scmp.ne.s32.totalorder %s61, %s64
    %p73 = scmp.eq.s32.totalorder %s18, 3
    %p74 = por %p72, %p73
    %p75 = scmp.ne.s32.totalorder %s64, %s65
    %p76 = scmp.eq.s32.totalorder %s18, 0
    %p77 = por %p75, %p76
    %p78 = scmp.ne.s32.totalorder %s64, %s65
    %p79 = scmp.eq.s32.totalorder %s19, 3
    %p80 = por %p78, %p79
    %p82 = scmp.ne.s32.totalorder %s65, %s81
    %p83 = scmp.eq.s32.totalorder %s19, 0
    %p84 = por %p82, %p83
    %s85 = ssub.s32 %s20, %s32
    %p86 = scmp.eq.s32.totalorder %s85, 0
    %s88 = sadd.s32 %s87, 1
    %s89 = scalar_select %p86, %s87, %s88
    %p92 = pneg %p86
    %p93 = scmp.eq.s32.totalorder %s13, 3
    %p94 = por %p92, %p93
    %p95 = scmp.ne.s32.totalorder %s87, %s90
    %p96 = scmp.eq.s32.totalorder %s13, 0
    %p97 = por %p95, %p96
    %p98 = scmp.ne.s32.totalorder %s87, %s90
    %p99 = scmp.eq.s32.totalorder %s18, 3
    %p100 = por %p98, %p99
    %p101 = scmp.ne.s32.totalorder %s90, %s91
    %p102 = scmp.eq.s32.totalorder %s18, 0
    %p103 = por %p101, %p102
    %p104 = scmp.ne.s32.totalorder %s90, %s91
    %p105 = scmp.eq.s32.totalorder %s19, 3
    %p106 = por %p104, %p105
    %p108 = scmp.ne.s32.totalorder %s91, %s107
    %p109 = scmp.eq.s32.totalorder %s19, 0
    %p110 = por %p108, %p109
    %s111 = ssub.s32 %s20, %s32
    %p112 = scmp.eq.s32.totalorder %s111, 0
    %s114 = sadd.s32 %s113, 1
    %s115 = scalar_select %p112, %s113, %s114
    %p118 = pneg %p112
    %p119 = scmp.eq.s32.totalorder %s13, 3
    %p120 = por %p118, %p119
    %p121 = scmp.ne.s32.totalorder %s113, %s116
    %p122 = scmp.eq.s32.totalorder %s13, 0
    %p123 = por %p121, %p122
    %p124 = scmp.ne.s32.totalorder %s113, %s116
    %p125 = scmp.eq.s32.totalorder %s18, 3
    %p126 = por %p124, %p125
    %p127 = scmp.ne.s32.totalorder %s116, %s117
    %p128 = scmp.eq.s32.totalorder %s18, 0
    %p129 = por %p127, %p128
    %p130 = scmp.ne.s32.totalorder %s116, %s117
    %p131 = scmp.eq.s32.totalorder %s19, 3
    %p132 = por %p130, %p131
    %p134 = scmp.ne.s32.totalorder %s117, %s133
    %p135 = scmp.eq.s32.totalorder %s19, 0
    %p136 = por %p134, %p135
    %s137 = ssub.s32 %s20, %s32
    %p138 = scmp.eq.s32.totalorder %s137, 0
    %s140 = sadd.s32 %s139, 1
    %s141 = scalar_select %p138, %s139, %s140
    %p144 = pneg %p138
    %p145 = scmp.eq.s32.totalorder %s13, 3
    %p146 = por %p144, %p145
    %p147 = scmp.ne.s32.totalorder %s139, %s142
    %p148 = scmp.eq.s32.totalorder %s13, 0
    %p149 = por %p147, %p148
    %p150 = scmp.ne.s32.totalorder %s139, %s142
    %p151 = scmp.eq.s32.totalorder %s18, 3
    %p152 = por %p150, %p151
    %p153 = scmp.ne.s32.totalorder %s142, %s143
    %p154 = scmp.eq.s32.totalorder %s18, 0
    %p155 = por %p153, %p154
    %p156 = scmp.ne.s32.totalorder %s142, %s143
    %p157 = scmp.eq.s32.totalorder %s19, 3
    %p158 = por %p156, %p157
    %p160 = scmp.ne.s32.totalorder %s143, %s159
    %p161 = scmp.eq.s32.totalorder %s19, 0
    %p162 = por %p160, %p161
    %s163 = ssub.s32 %s20, %s32
    %p164 = scmp.eq.s32.totalorder %s163, 0
    %s166 = sadd.s32 %s165, 1
    %s167 = scalar_select %p164, %s165, %s166
    %p170 = pneg %p164
    %p171 = scmp.eq.s32.totalorder %s13, 3
    %p172 = por %p170, %p171
    %p173 = scmp.ne.s32.totalorder %s165, %s168
    %p174 = scmp.eq.s32.totalorder %s13, 0
    %p175 = por %p173, %p174
    %p176 = scmp.ne.s32.totalorder %s165, %s168
    %p177 = scmp.eq.s32.totalorder %s18, 3
    %p178 = por %p176, %p177
    %p179 = scmp.ne.s32.totalorder %s168, %s169
    %p180 = scmp.eq.s32.totalorder %s18, 0
    %p181 = por %p179, %p180
    %p182 = scmp.ne.s32.totalorder %s168, %s169
    %p183 = scmp.eq.s32.totalorder %s19, 3
    %p184 = por %p182, %p183
    %p186 = scmp.ne.s32.totalorder %s169, %s185
    %p187 = scmp.eq.s32.totalorder %s19, 0
    %p188 = por %p186, %p187
    %s189 = ssub.s32 %s20, %s32
    %p190 = scmp.eq.s32.totalorder %s189, 0
    %s192 = sadd.s32 %s191, 1
    %s193 = scalar_select %p190, %s191, %s192
    %p196 = pneg %p190
    %p197 = scmp.eq.s32.totalorder %s13, 3
    %p198 = por %p196, %p197
    %p199 = scmp.ne.s32.totalorder %s191, %s194
    %p200 = scmp.eq.s32.totalorder %s13, 0
    %p201 = por %p199, %p200
    %p202 = scmp.ne.s32.totalorder %s191, %s194
    %p203 = scmp.eq.s32.totalorder %s18, 3
    %p204 = por %p202, %p203
    %p205 = scmp.ne.s32.totalorder %s194, %s195
    %p206 = scmp.eq.s32.totalorder %s18, 0
    %p207 = por %p205, %p206
    %p208 = scmp.ne.s32.totalorder %s194, %s195
    %p209 = scmp.eq.s32.totalorder %s19, 3
    %p210 = por %p208, %p209
    %p212 = scmp.ne.s32.totalorder %s195, %s211
    %p213 = scmp.eq.s32.totalorder %s19, 0
    %p214 = por %p212, %p213
    %s215 = ssub.s32 %s20, %s32
    %s216 = ssub.s32 %s21, %s28
    %s217 = sor.u32 %s215, %s216
    %p218 = scmp.eq.s32.totalorder %s217, 0
    %s220 = sadd.s32 %s219, 1
    %s221 = scalar_select %p218, %s219, %s220
    %p224 = pneg %p218
    %p225 = scmp.eq.s32.totalorder %s13, 3
    %p226 = por %p224, %p225
    %p227 = scmp.ne.s32.totalorder %s219, %s222
    %p228 = scmp.eq.s32.totalorder %s13, 0
    %p229 = por %p227, %p228
    %p230 = scmp.ne.s32.totalorder %s219, %s222
    %p231 = scmp.eq.s32.totalorder %s18, 3
    %p232 = por %p230, %p231
    %p233 = scmp.ne.s32.totalorder %s222, %s223
    %p234 = scmp.eq.s32.totalorder %s18, 0
    %p235 = por %p233, %p234
    %p236 = scmp.ne.s32.totalorder %s222, %s223
    %p237 = scmp.eq.s32.totalorder %s19, 3
    %p238 = por %p236, %p237
    %p240 = scmp.ne.s32.totalorder %s223, %s239
    %p241 = scmp.eq.s32.totalorder %s19, 0
    %p242 = por %p240, %p241
    %p243 = scmp.le.s32.totalorder 1, %s13
    %p244 = scmp.lt.s32.totalorder %s13, 5
    %p245 = pnand %p243, %p244
    %p246 = pneg %p245
    // Predicated region
    $region9: #{rnd_forward.1} parent=5 // pred_check
      _
    $region10: #{rnd_forward.1} parent=5 // pred_check_branch
      %248 = sbr.rel (%p245) target = $region12
    $region11: #{rnd_forward.1} parent=5 // pred_region
      %s249 = ssub.s32 %s13, 1
    $region12: #{rnd_forward.1} parent=5 // pred_fallthru
      _
    %p250 = scmp.lt.s32.totalorder %s13, 4
    // Predicated region
    $region13: #{rnd_forward.1} parent=5 // pred_check
      %p251 = pneg %p250
    $region14: #{rnd_forward.1} parent=5 // pred_check_branch
      %253 = sbr.rel (%p251) target = $region16
    $region15: #{rnd_forward.1} parent=5 // pred_region
      // Predicated region
      $region17: #{rnd_forward.1} parent=15 // pred_check
        %p254 = pneg %p45
      $region18: #{rnd_forward.1} parent=15 // pred_check_branch
        %256 = sbr.rel (%p254) target = $region20
      $region19: #{rnd_forward.1} parent=15 // pred_region
        %s257 = smul.u32 4, %s21
        %p258 = scmp.lt.s32.totalorder %s257, 7
        %s259 = scalar_select %p258, %s257, 7
        %s260 = smul.addr %s259, 8
        %s261 = scalar_lea.vmem %s0, %s260
        %s262 = smul.u32 4, %s21
      $region20: #{rnd_forward.1} parent=15 // pred_fallthru
        _
      // Predicated region
      $region21: #{rnd_forward.1} parent=15 // pred_check
        %p263 = pneg %p71
      $region22: #{rnd_forward.1} parent=15 // pred_check_branch
        %265 = sbr.rel (%p263) target = $region24
      $region23: #{rnd_forward.1} parent=15 // pred_region
        %p266 = scmp.lt.s32.totalorder %s20, 1
        %s267 = scalar_select %p266, %s20, 1
        %s268 = smul.addr %s267, 8
        %s269 = smul.addr %s268, 4
        %s270 = scalar_lea.vmem %s1, %s269
      $region24: #{rnd_forward.1} parent=15 // pred_fallthru
        _
      // Predicated region
      $region25: #{rnd_forward.1} parent=15 // pred_check
        %p271 = pneg %p97
      $region26: #{rnd_forward.1} parent=15 // pred_check_branch
        %273 = sbr.rel (%p271) target = $region28
      $region27: #{rnd_forward.1} parent=15 // pred_region
        %p274 = scmp.lt.s32.totalorder %s20, 1
        %s275 = scalar_select %p274, %s20, 1
        %s276 = scalar_lea.vmem %s2, %s275
      $region28: #{rnd_forward.1} parent=15 // pred_fallthru
        _
      // Predicated region
      $region29: #{rnd_forward.1} parent=15 // pred_check
        %p277 = pneg %p123
      $region30: #{rnd_forward.1} parent=15 // pred_check_branch
        %279 = sbr.rel (%p277) target = $region32
      $region31: #{rnd_forward.1} parent=15 // pred_region
        %p280 = scmp.lt.s32.totalorder %s20, 1
        %s281 = scalar_select %p280, %s20, 1
        %s282 = smul.addr %s281, 16
        %s283 = smul.addr %s282, 4
        %s284 = scalar_lea.vmem %s3, %s283
      $region32: #{rnd_forward.1} parent=15 // pred_fallthru
        _
      // Predicated region
      $region33: #{rnd_forward.1} parent=15 // pred_check
        %p285 = pneg %p149
      $region34: #{rnd_forward.1} parent=15 // pred_check_branch
        %287 = sbr.rel (%p285) target = $region36
      $region35: #{rnd_forward.1} parent=15 // pred_region
        %p288 = scmp.lt.s32.totalorder %s20, 1
        %s289 = scalar_select %p288, %s20, 1
        %s290 = scalar_lea.vmem %s4, %s289
      $region36: #{rnd_forward.1} parent=15 // pred_fallthru
        _
      // Predicated region
      $region37: #{rnd_forward.1} parent=15 // pred_check
        %p291 = pneg %p175
      $region38: #{rnd_forward.1} parent=15 // pred_check_branch
        %293 = sbr.rel (%p291) target = $region40
      $region39: #{rnd_forward.1} parent=15 // pred_region
        %p294 = scmp.lt.s32.totalorder %s20, 1
        %s295 = scalar_select %p294, %s20, 1
        %s296 = smul.addr %s295, 16
        %s297 = smul.addr %s296, 4
        %s298 = scalar_lea.vmem %s5, %s297
      $region40: #{rnd_forward.1} parent=15 // pred_fallthru
        _
      // Predicated region
      $region41: #{rnd_forward.1} parent=15 // pred_check
        %p299 = pneg %p201
      $region42: #{rnd_forward.1} parent=15 // pred_check_branch
        %301 = sbr.rel (%p299) target = $region44
      $region43: #{rnd_forward.1} parent=15 // pred_region
        %p302 = scmp.lt.s32.totalorder %s20, 1
        %s303 = scalar_select %p302, %s20, 1
        %s304 = scalar_lea.vmem %s6, %s303
      $region44: #{rnd_forward.1} parent=15 // pred_fallthru
        _
    $region16: #{rnd_forward.1} parent=5 // pred_fallthru
      _
    %p305 = scmp.le.s32.totalorder 1, %s13
    %p306 = scmp.lt.s32.totalorder %s13, 5
    %p307 = pnand %p305, %p306
    %p308 = pneg %p307
    // Predicated region
    $region45: #{rnd_forward.1} parent=5 // pred_check
      _
    $region46: #{rnd_forward.1} parent=5 // pred_check_branch
      %310 = sbr.rel (%p307) target = $region48
    $region47: #{rnd_forward.1} parent=5 // pred_region
      %s311 = ssub.s32 %s13, 1
      %s312 = smul.u32 4, %s23
      %p313 = scmp.lt.s32.totalorder %s312, 7
      %s314 = scalar_select %p313, %s312, 7
      %s315 = smul.addr %s314, 8
      %s316 = scalar_lea.vmem %s0, %s315
      %p317 = pneg %p51
      %p318 = pneg %p48
      %p319 = scmp.lt.s32.totalorder %s22, 1
      %s320 = scalar_select %p319, %s22, 1
      %s321 = smul.addr %s320, 8
      %s322 = smul.addr %s321, 4
      %s323 = scalar_lea.vmem %s1, %s322
      %p324 = pneg %p77
      %p325 = pneg %p74
      %p326 = scmp.lt.s32.totalorder %s22, 1
      %s327 = scalar_select %p326, %s22, 1
      %s328 = scalar_lea.vmem %s2, %s327
      %p329 = pneg %p103
      %p330 = pneg %p100
      %p331 = scmp.lt.s32.totalorder %s22, 1
      %s332 = scalar_select %p331, %s22, 1
      %s333 = smul.addr %s332, 16
      %s334 = smul.addr %s333, 4
      %s335 = scalar_lea.vmem %s3, %s334
      %p336 = pneg %p129
      %p337 = pneg %p126
      %p338 = scmp.lt.s32.totalorder %s22, 1
      %s339 = scalar_select %p338, %s22, 1
      %s340 = scalar_lea.vmem %s4, %s339
      %p341 = pneg %p155
      %p342 = pneg %p152
      %p343 = scmp.lt.s32.totalorder %s22, 1
      %s344 = scalar_select %p343, %s22, 1
      %s345 = smul.addr %s344, 16
      %s346 = smul.addr %s345, 4
      %s347 = scalar_lea.vmem %s5, %s346
      %p348 = pneg %p181
      %p349 = pneg %p178
      %p350 = scmp.lt.s32.totalorder %s22, 1
      %s351 = scalar_select %p350, %s22, 1
      %s352 = scalar_lea.vmem %s6, %s351
      %p353 = pneg %p207
      %p354 = pneg %p204
      %p355 = pneg %p235
      %p356 = pneg %p232
      %s357 = smul.u32 4, %s23
      %p358 = scmp.lt.s32.totalorder %s22, 1
      %s359 = scalar_select %p358, %s22, 1
      %p360 = scmp.lt.s32.totalorder %s357, 7
      %s361 = scalar_select %p360, %s357, 7
      %s362 = smul.addr %s359, 8
      %s363 = sadd.s32 %s361, %s362
      %s364 = smul.addr %s363, 8
      %s365 = scalar_lea.vmem %s7, %s364
      %s366 = smul.u32 4, %s23
      %p367 = scmp.lt.s32.totalorder %s366, 7
      %s368 = scalar_select %p367, %s366, 7
      %s369 = smul.addr %s368, 8
      %s370 = scalar_lea.vmem %s0, %s369
      %s371 = smul.u32 4, %s23
      %p372 = scmp.lt.s32.totalorder %s22, 1
      %s373 = scalar_select %p372, %s22, 1
      %s374 = smul.addr %s373, 8
      %s375 = smul.addr %s374, 4
      %s376 = scalar_lea.vmem %s1, %s375
      %p377 = scmp.lt.s32.totalorder %s22, 1
      %s378 = scalar_select %p377, %s22, 1
      %s379 = scalar_lea.vmem %s2, %s378
      %p380 = scmp.lt.s32.totalorder %s22, 1
      %s381 = scalar_select %p380, %s22, 1
      %s382 = smul.addr %s381, 16
      %s383 = smul.addr %s382, 4
      %s384 = scalar_lea.vmem %s3, %s383
      %p385 = scmp.lt.s32.totalorder %s22, 1
      %s386 = scalar_select %p385, %s22, 1
      %s387 = scalar_lea.vmem %s4, %s386
      %p388 = scmp.lt.s32.totalorder %s22, 1
      %s389 = scalar_select %p388, %s22, 1
      %s390 = smul.addr %s389, 16
      %s391 = smul.addr %s390, 4
      %s392 = scalar_lea.vmem %s5, %s391
      %p393 = scmp.lt.s32.totalorder %s22, 1
      %s394 = scalar_select %p393, %s22, 1
      %s395 = scalar_lea.vmem %s6, %s394
      %s396 = smul.u32 4, %s23
      %p397 = scmp.lt.s32.totalorder %s22, 1
      %s398 = scalar_select %p397, %s22, 1
      %p399 = scmp.lt.s32.totalorder %s396, 7
      %s400 = scalar_select %p399, %s396, 7
      %s401 = smul.addr %s398, 8
      %s402 = sadd.s32 %s400, %s401
      %s403 = smul.addr %s402, 8
      %s404 = scalar_lea.vmem %s7, %s403
      %s405 = smul.u32 4, %s23
      %v407 = vld [vmem:[%s370] sm:$0xff]
      %v408 = vld [vmem:[%s370 + $0x8] sm:$0xff]
      %v409 = vld [vmem:[%s370 + $0x10] sm:$0xff]
      %v410 = vld [vmem:[%s370 + $0x18] sm:$0xff]
      %v411 = vpack.c.bf16 %v408, %v407
      %v412 = vpack.c.bf16 %v410, %v409
      %v413 = vld [vmem:[%s376] sm:$0xf]
      %v414 = vld [vmem:[%s376 + $0x4] sm:$0xf]
      %v415 = vld [vmem:[%s376 + $0x8] sm:$0xf]
      %v416 = vld [vmem:[%s376 + $0xc] sm:$0xf]
      %v417 = vld [vmem:[%s376 + $0x10] sm:$0xf]
      %v418 = vld [vmem:[%s376 + $0x14] sm:$0xf]
      %v419 = vld [vmem:[%s376 + $0x18] sm:$0xf]
      %v420 = vld [vmem:[%s376 + $0x1c] sm:$0xf]
      %v421 = vld [vmem:[%s379] sm:$0x1]
      %v423 = vlaneseq
      %v424 = vshrl.u32 %v423, 7
      %v425 = vsub.s32 0, %v424
      %v426 = vrot.slane %v421, %v425
      %v436 = vunpack.c.l.b16 %v413
      %v437 = vunpack.c.l.b16 %v414
      %v438 = vunpack.c.l.b16 %v415
      %v439 = vunpack.c.l.b16 %v416
      %v440 = vunpack.c.l.b16 %v417
      %v441 = vunpack.c.l.b16 %v418
      %v442 = vunpack.c.l.b16 %v419
      %v443 = vunpack.c.l.b16 %v420
      %v444 = vpack.c.b16 %v437, %v436
      %v445 = vpack.c.b16 %v439, %v438
      %v446 = vpack.c.b16 %v441, %v440
      %v447 = vpack.c.b16 %v443, %v442
      %vm452 = vcmask 523264
      %v454 = vsel %vm452, %v411, 0
      %v457 = vsel %vm452, %v412, 0
      %459 = vmatprep.subr.bf16.mxu0 0
      %460 = vmatpush1.bf16.msra.mxu0 %v444
      %461 = vmatprep.subr.bf16.mxu0 0
      %462 = vmatpush1.bf16.msra.mxu0 %v445
      %463 = vmatprep.subr.bf16.mxu0 0
      %464 = vmatpush1.bf16.msra.mxu0 %v446
      %465 = vmatprep.subr.bf16.mxu0 0
      %466 = vmatpush1.bf16.msra.mxu0 %v447
      %467 = vmatprep.subr.bf16.mxu0 0
      %468 = vmatpush1.bf16.msra.mxu0 0
      %469 = vmatprep.subr.bf16.mxu0 0
      %470 = vmatpush1.bf16.msra.mxu0 0
      %471 = vmatprep.subr.bf16.mxu0 0
      %472 = vmatpush1.bf16.msra.mxu0 0
      %473 = vmatprep.subr.bf16.mxu0 0
      %474 = vmatpush1.bf16.msra.mxu0 0
      %475 = vmatprep.subr.bf16.mxu0 0
      %476 = vmatpush1.bf16.msra.mxu0 0
      %477 = vmatprep.subr.bf16.mxu0 0
      %478 = vmatpush1.bf16.msra.mxu0 0
      %479 = vmatprep.subr.bf16.mxu0 0
      %480 = vmatpush1.bf16.msra.mxu0 0
      %481 = vmatprep.subr.bf16.mxu0 0
      %482 = vmatpush1.bf16.msra.mxu0 0
      %483 = vmatprep.subr.bf16.mxu0 0
      %484 = vmatpush1.bf16.msra.mxu0 0
      %485 = vmatprep.subr.bf16.mxu0 0
      %486 = vmatpush1.bf16.msra.mxu0 0
      %487 = vmatprep.subr.bf16.mxu0 0
      %488 = vmatpush1.bf16.msra.mxu0 0
      %489 = vmatprep.subr.bf16.mxu0 0
      %490 = vmatpush1.bf16.msra.mxu0 0
      %491 = vmatprep.mubr.bf16.mxu0 0
      %492 = vmatmul.mubr.bf16.gmra.mrb[0].mxu0 %v454
      %v493 = vpop.f32.mrb[0].mxu0
      %v494 = vadd.f32 %v426, %v493
      %v495 = vpop.f32.mrb[0].mxu0
      %v496 = vpop.f32.mrb[0].mxu0
      %v497 = vadd.f32 %v426, %v496
      %v498 = vpop.f32.mrb[0].mxu0
      %499 = vmatprep.mubr.bf16.mxu0 0
      %500 = vmatmul.mubr.bf16.gmra.mrb[0].mxu0 %v457
      %v501 = vpop.f32.mrb[0].mxu0
      %v502 = vadd.f32 %v426, %v501
      %v503 = vpop.f32.mrb[0].mxu0
      %v504 = vpop.f32.mrb[0].mxu0
      %v505 = vadd.f32 %v426, %v504
      %v506 = vpop.f32.mrb[0].mxu0
      %507 = vdwg.mxu0
      %v508 = vmax.f32 %v494, 0.0
      %v509 = vmax.f32 %v497, 0.0
      %v510 = vmax.f32 %v502, 0.0
      %v511 = vmax.f32 %v505, 0.0
      %v512 = vpack.c.bf16 %v509, %v508
      %v513 = vpack.c.bf16 %v511, %v510
      %v514 = vld [vmem:[%s384] sm:$0xf]
      %v515 = vld [vmem:[%s384 + $0x4] sm:$0xf]
      %v516 = vld [vmem:[%s384 + $0x8] sm:$0xf]
      %v517 = vld [vmem:[%s384 + $0xc] sm:$0xf]
      %v518 = vld [vmem:[%s384 + $0x10] sm:$0xf]
      %v519 = vld [vmem:[%s384 + $0x14] sm:$0xf]
      %v520 = vld [vmem:[%s384 + $0x18] sm:$0xf]
      %v521 = vld [vmem:[%s384 + $0x1c] sm:$0xf]
      %v522 = vld [vmem:[%s384 + $0x20] sm:$0xf]
      %v523 = vld [vmem:[%s384 + $0x24] sm:$0xf]
      %v524 = vld [vmem:[%s384 + $0x28] sm:$0xf]
      %v525 = vld [vmem:[%s384 + $0x2c] sm:$0xf]
      %v526 = vld [vmem:[%s384 + $0x30] sm:$0xf]
      %v527 = vld [vmem:[%s384 + $0x34] sm:$0xf]
      %v528 = vld [vmem:[%s384 + $0x38] sm:$0xf]
      %v529 = vld [vmem:[%s384 + $0x3c] sm:$0xf]
      %v530 = vld [vmem:[%s387] sm:$0x1]
      %v532 = vlaneseq
      %v533 = vshrl.u32 %v532, 7
      %v534 = vsub.s32 0, %v533
      %v535 = vrot.slane %v530, %v534
      %v553 = vunpack.c.l.b16 %v514
      %v554 = vunpack.c.l.b16 %v515
      %v555 = vunpack.c.l.b16 %v516
      %v556 = vunpack.c.l.b16 %v517
      %v557 = vunpack.c.l.b16 %v518
      %v558 = vunpack.c.l.b16 %v519
      %v559 = vunpack.c.l.b16 %v520
      %v560 = vunpack.c.l.b16 %v521
      %v561 = vunpack.c.l.b16 %v522
      %v562 = vunpack.c.l.b16 %v523
      %v563 = vunpack.c.l.b16 %v524
      %v564 = vunpack.c.l.b16 %v525
      %v565 = vunpack.c.l.b16 %v526
      %v566 = vunpack.c.l.b16 %v527
      %v567 = vunpack.c.l.b16 %v528
      %v568 = vunpack.c.l.b16 %v529
      %v569 = vpack.c.b16 %v554, %v553
      %v570 = vpack.c.b16 %v556, %v555
      %v571 = vpack.c.b16 %v558, %v557
      %v572 = vpack.c.b16 %v560, %v559
      %v573 = vpack.c.b16 %v562, %v561
      %v574 = vpack.c.b16 %v564, %v563
      %v575 = vpack.c.b16 %v566, %v565
      %v576 = vpack.c.b16 %v568, %v567
      %585 = vmatprep.subr.bf16.mxu0 0
      %586 = vmatpush1.bf16.msra.mxu0 %v569
      %587 = vmatprep.subr.bf16.mxu0 0
      %588 = vmatpush1.bf16.msra.mxu0 %v570
      %589 = vmatprep.subr.bf16.mxu0 0
      %590 = vmatpush1.bf16.msra.mxu0 %v571
      %591 = vmatprep.subr.bf16.mxu0 0
      %592 = vmatpush1.bf16.msra.mxu0 %v572
      %593 = vmatprep.subr.bf16.mxu0 0
      %594 = vmatpush1.bf16.msra.mxu0 %v573
      %595 = vmatprep.subr.bf16.mxu0 0
      %596 = vmatpush1.bf16.msra.mxu0 %v574
      %597 = vmatprep.subr.bf16.mxu0 0
      %598 = vmatpush1.bf16.msra.mxu0 %v575
      %599 = vmatprep.subr.bf16.mxu0 0
      %600 = vmatpush1.bf16.msra.mxu0 %v576
      %601 = vmatprep.subr.bf16.mxu0 0
      %602 = vmatpush1.bf16.msra.mxu0 0
      %603 = vmatprep.subr.bf16.mxu0 0
      %604 = vmatpush1.bf16.msra.mxu0 0
      %605 = vmatprep.subr.bf16.mxu0 0
      %606 = vmatpush1.bf16.msra.mxu0 0
      %607 = vmatprep.subr.bf16.mxu0 0
      %608 = vmatpush1.bf16.msra.mxu0 0
      %609 = vmatprep.subr.bf16.mxu0 0
      %610 = vmatpush1.bf16.msra.mxu0 0
      %611 = vmatprep.subr.bf16.mxu0 0
      %612 = vmatpush1.bf16.msra.mxu0 0
      %613 = vmatprep.subr.bf16.mxu0 0
      %614 = vmatpush1.bf16.msra.mxu0 0
      %615 = vmatprep.subr.bf16.mxu0 0
      %616 = vmatpush1.bf16.msra.mxu0 0
      %617 = vmatprep.mubr.bf16.mxu0 0
      %618 = vmatmul.mubr.bf16.gmra.mrb[0].mxu0 %v512
      %v619 = vpop.f32.mrb[0].mxu0
      %v620 = vadd.f32 %v535, %v619
      %v621 = vpop.f32.mrb[0].mxu0
      %v622 = vpop.f32.mrb[0].mxu0
      %v623 = vadd.f32 %v535, %v622
      %v624 = vpop.f32.mrb[0].mxu0
      %625 = vmatprep.mubr.bf16.mxu0 0
      %626 = vmatmul.mubr.bf16.gmra.mrb[0].mxu0 %v513
      %v627 = vpop.f32.mrb[0].mxu0
      %v628 = vadd.f32 %v535, %v627
      %v629 = vpop.f32.mrb[0].mxu0
      %v630 = vpop.f32.mrb[0].mxu0
      %v631 = vadd.f32 %v535, %v630
      %v632 = vpop.f32.mrb[0].mxu0
      %633 = vdwg.mxu0
      %v634 = vmax.f32 %v620, 0.0
      %v635 = vmax.f32 %v623, 0.0
      %v636 = vmax.f32 %v628, 0.0
      %v637 = vmax.f32 %v631, 0.0
      %v638 = vpack.c.bf16 %v635, %v634
      %v639 = vpack.c.bf16 %v637, %v636
      %v640 = vld [vmem:[%s392] sm:$0xf]
      %v641 = vld [vmem:[%s392 + $0x4] sm:$0xf]
      %v642 = vld [vmem:[%s392 + $0x8] sm:$0xf]
      %v643 = vld [vmem:[%s392 + $0xc] sm:$0xf]
      %v644 = vld [vmem:[%s392 + $0x10] sm:$0xf]
      %v645 = vld [vmem:[%s392 + $0x14] sm:$0xf]
      %v646 = vld [vmem:[%s392 + $0x18] sm:$0xf]
      %v647 = vld [vmem:[%s392 + $0x1c] sm:$0xf]
      %v648 = vld [vmem:[%s392 + $0x20] sm:$0xf]
      %v649 = vld [vmem:[%s392 + $0x24] sm:$0xf]
      %v650 = vld [vmem:[%s392 + $0x28] sm:$0xf]
      %v651 = vld [vmem:[%s392 + $0x2c] sm:$0xf]
      %v652 = vld [vmem:[%s392 + $0x30] sm:$0xf]
      %v653 = vld [vmem:[%s392 + $0x34] sm:$0xf]
      %v654 = vld [vmem:[%s392 + $0x38] sm:$0xf]
      %v655 = vld [vmem:[%s392 + $0x3c] sm:$0xf]
      %v656 = vld [vmem:[%s395] sm:$0x1]
      %v658 = vlaneseq
      %v659 = vshrl.u32 %v658, 7
      %v660 = vsub.s32 0, %v659
      %v661 = vrot.slane %v656, %v660
      %v679 = vunpack.c.l.b16 %v640
      %v680 = vunpack.c.l.b16 %v641
      %v681 = vunpack.c.l.b16 %v642
      %v682 = vunpack.c.l.b16 %v643
      %v683 = vunpack.c.l.b16 %v644
      %v684 = vunpack.c.l.b16 %v645
      %v685 = vunpack.c.l.b16 %v646
      %v686 = vunpack.c.l.b16 %v647
      %v687 = vunpack.c.l.b16 %v648
      %v688 = vunpack.c.l.b16 %v649
      %v689 = vunpack.c.l.b16 %v650
      %v690 = vunpack.c.l.b16 %v651
      %v691 = vunpack.c.l.b16 %v652
      %v692 = vunpack.c.l.b16 %v653
      %v693 = vunpack.c.l.b16 %v654
      %v694 = vunpack.c.l.b16 %v655
      %v695 = vpack.c.b16 %v680, %v679
      %v696 = vpack.c.b16 %v682, %v681
      %v697 = vpack.c.b16 %v684, %v683
      %v698 = vpack.c.b16 %v686, %v685
      %v699 = vpack.c.b16 %v688, %v687
      %v700 = vpack.c.b16 %v690, %v689
      %v701 = vpack.c.b16 %v692, %v691
      %v702 = vpack.c.b16 %v694, %v693
      %711 = vmatprep.subr.bf16.mxu0 0
      %712 = vmatpush1.bf16.msra.mxu0 %v695
      %713 = vmatprep.subr.bf16.mxu0 0
      %714 = vmatpush1.bf16.msra.mxu0 %v696
      %715 = vmatprep.subr.bf16.mxu0 0
      %716 = vmatpush1.bf16.msra.mxu0 %v697
      %717 = vmatprep.subr.bf16.mxu0 0
      %718 = vmatpush1.bf16.msra.mxu0 %v698
      %719 = vmatprep.subr.bf16.mxu0 0
      %720 = vmatpush1.bf16.msra.mxu0 %v699
      %721 = vmatprep.subr.bf16.mxu0 0
      %722 = vmatpush1.bf16.msra.mxu0 %v700
      %723 = vmatprep.subr.bf16.mxu0 0
      %724 = vmatpush1.bf16.msra.mxu0 %v701
      %725 = vmatprep.subr.bf16.mxu0 0
      %726 = vmatpush1.bf16.msra.mxu0 %v702
      %727 = vmatprep.subr.bf16.mxu0 0
      %728 = vmatpush1.bf16.msra.mxu0 0
      %729 = vmatprep.subr.bf16.mxu0 0
      %730 = vmatpush1.bf16.msra.mxu0 0
      %731 = vmatprep.subr.bf16.mxu0 0
      %732 = vmatpush1.bf16.msra.mxu0 0
      %733 = vmatprep.subr.bf16.mxu0 0
      %734 = vmatpush1.bf16.msra.mxu0 0
      %735 = vmatprep.subr.bf16.mxu0 0
      %736 = vmatpush1.bf16.msra.mxu0 0
      %737 = vmatprep.subr.bf16.mxu0 0
      %738 = vmatpush1.bf16.msra.mxu0 0
      %739 = vmatprep.subr.bf16.mxu0 0
      %740 = vmatpush1.bf16.msra.mxu0 0
      %741 = vmatprep.subr.bf16.mxu0 0
      %742 = vmatpush1.bf16.msra.mxu0 0
      %743 = vmatprep.mubr.bf16.mxu0 0
      %744 = vmatmul.mubr.bf16.gmra.mrb[0].mxu0 %v638
      %v745 = vpop.f32.mrb[0].mxu0
      %v746 = vadd.f32 %v661, %v745
      %v747 = vpop.f32.mrb[0].mxu0
      %v748 = vpop.f32.mrb[0].mxu0
      %v749 = vadd.f32 %v661, %v748
      %v750 = vpop.f32.mrb[0].mxu0
      %751 = vmatprep.mubr.bf16.mxu0 0
      %752 = vmatmul.mubr.bf16.gmra.mrb[0].mxu0 %v639
      %v753 = vpop.f32.mrb[0].mxu0
      %v754 = vadd.f32 %v661, %v753
      %v755 = vpop.f32.mrb[0].mxu0
      %v756 = vpop.f32.mrb[0].mxu0
      %v757 = vadd.f32 %v661, %v756
      %v758 = vpop.f32.mrb[0].mxu0
      %759 = vdwg.mxu0
      %760 = vst [vmem:[%s404] sm:$0xff] %v746
      %761 = vst [vmem:[%s404 + $0x8] sm:$0xff] %v749
      %762 = vst [vmem:[%s404 + $0x10] sm:$0xff] %v754
      %763 = vst [vmem:[%s404 + $0x18] sm:$0xff] %v757
      %s764 = smul.u32 4, %s23
      %p765 = scmp.lt.s32.totalorder %s22, 1
      %s766 = scalar_select %p765, %s22, 1
      %p767 = scmp.lt.s32.totalorder %s764, 7
      %s768 = scalar_select %p767, %s764, 7
      %s769 = smul.addr %s766, 8
      %s770 = sadd.s32 %s768, %s769
      %s771 = smul.addr %s770, 8
      %s772 = scalar_lea.vmem %s7, %s771
      // Predicated region
      $region49: #{rnd_forward.1} parent=47 // pred_check
        %p773 = pneg %p232
      $region50: #{rnd_forward.1} parent=47 // pred_check_branch
        %775 = sbr.rel (%p773) target = $region52
      $region51: #{rnd_forward.1} parent=47 // pred_region
        %s776 = smul.u32 4, %s23
      $region52: #{rnd_forward.1} parent=47 // pred_fallthru
        _
    $region48: #{rnd_forward.1} parent=5 // pred_fallthru
      _
    %p777 = scmp.le.s32.totalorder 2, %s13
    // Predicated region
    $region53: #{rnd_forward.1} parent=5 // pred_check
      %p778 = pneg %p777
    $region54: #{rnd_forward.1} parent=5 // pred_check_branch
      %780 = sbr.rel (%p778) target = $region56
    $region55: #{rnd_forward.1} parent=5 // pred_region
      %s781 = ssub.s32 %s13, 2
      // Predicated region
      $region57: #{rnd_forward.1} parent=55 // pred_check
        %p782 = pneg %p238
      $region58: #{rnd_forward.1} parent=55 // pred_check_branch
        %784 = sbr.rel (%p782) target = $region60
      $region59: #{rnd_forward.1} parent=55 // pred_region
        %s785 = smul.u32 4, %s25
        %p786 = scmp.lt.s32.totalorder %s24, 1
        %s787 = scalar_select %p786, %s24, 1
        %p788 = scmp.lt.s32.totalorder %s785, 7
        %s789 = scalar_select %p788, %s785, 7
        %s790 = smul.addr %s787, 8
        %s791 = sadd.s32 %s789, %s790
        %s792 = smul.addr %s791, 8
        %s793 = scalar_lea.vmem %s7, %s792
      $region60: #{rnd_forward.1} parent=55 // pred_fallthru
        _
    $region56: #{rnd_forward.1} parent=5 // pred_fallthru
      _
  $region6: #{rnd_forward.1} parent=0 // loop_footer
    %s17 = sadd.s32 1, %s13
  $region7: #{rnd_forward.1} parent=0 // loop_footer_branch
    %12 = sbr.rel target = $region3
  $region8: #{rnd_forward.1} parent=0 // loop_exit
    _

</llo_original>
